<compile_context>
chip_gen: v7x
topology: tpu7x:2x2x1
jax: 0.10.0
libtpu: 0.0.40
codegen_flags: <defaults>
</compile_context>

<pallas_src>
import jax
import jax.numpy as jnp
from jax.experimental import pallas as pl
from jax.experimental.pallas import tpu as pltpu


def _round_up(n: int, m: int) -> int:
    return ((n + m - 1) // m) * m


def mlp_kernel(x_ref, w1_ref, b1_ref, w2_ref, b2_ref, o_ref):
    # x_ref: (TB, F) f32 ; w1_ref: (F, H) bf16 ; b1_ref: (1, H) f32
    # w2_ref: (H, O) bf16 ; b2_ref: (1, O) f32 ; o_ref: (TB, O) f32
    x = x_ref[...].astype(w1_ref.dtype)                       # bf16 MXU inputs
    h = jnp.dot(x, w1_ref[...], preferred_element_type=jnp.float32)
    h = jnp.maximum(h + b1_ref[...], 0.0)                     # bias + ReLU in f32 (VPU)
    y = jnp.dot(h.astype(w2_ref.dtype), w2_ref[...],
                preferred_element_type=jnp.float32)           # bf16 in, f32 accumulate
    o_ref[...] = (y + b2_ref[...]).astype(o_ref.dtype)


def prepare_params(w1, b1, w2, b2):
    """One-time transform of PyTorch-layout params (out,in) -> kernel layout.

    Hoisted out of the per-call path so repeated forwards don't re-transpose /
    re-cast the weights in HBM every call.
    """
    w1_t = jnp.asarray(w1, jnp.float32).T.astype(jnp.bfloat16)   # (F, H)
    w2_t = jnp.asarray(w2, jnp.float32).T.astype(jnp.bfloat16)   # (H, O)
    b1_r = jnp.asarray(b1, jnp.float32).reshape(1, -1)           # (1, H)
    b2_r = jnp.asarray(b2, jnp.float32).reshape(1, -1)           # (1, O)
    return w1_t, b1_r, w2_t, b2_r


def net_forward(x, params, *, block_b: int = 1024):
    """Forward pass of Net.  x: (B, n_feature) f32 -> (B, n_output) f32."""
    w1_t, b1_r, w2_t, b2_r = params
    B, F = x.shape
    H = w1_t.shape[1]
    O = w2_t.shape[1]

    # Minimal batch padding only (to a multiple of 16, NOT to a multiple of TB).
    B_pad = _round_up(B, 16)
    if B_pad != B:
        x = jnp.pad(x, ((0, B_pad - B), (0, 0)))

    # Batch tile: multiple of 16 (defensive), <= B_pad, and capped so that the
    # batch grid has >= 2 steps when there is enough work (v7x megacore).
    block_b = _round_up(max(int(block_b), 16), 16)
    TB = min(block_b, B_pad)
    if B_pad >= 32:
        TB = min(TB, _round_up(pl.cdiv(B_pad, 2), 16))

    def vmem_estimate(tb):
        # double-buffered x/out tiles + (double-buffered) resident weights/biases
        # + live intermediates.
        return (2 * tb * F * 4 + 2 * tb * O * 4
                + 2 * (F * H + H * O) * 2 + 2 * (H + O) * 4
                + tb * (F * 2 + H * 4 + H * 2 + O * 4))

    # Shrink TB if the tiles would blow a conservative VMEM budget.
    while TB > 16 and vmem_estimate(TB) > 48 * 1024 * 1024:
        TB = max(16, _round_up(TB // 2, 16))

    est = vmem_estimate(TB)
    vmem_limit = None
    if est > 16 * 1024 * 1024:  # above v5e's default scoped limit -> raise it
        vmem_limit = min(int(est * 5 // 4), 100 * 1024 * 1024)

    grid = (pl.cdiv(B_pad, TB),)

    flops = 2 * B_pad * (F * H + H * O)
    bytes_accessed = (B_pad * F * 4 + F * H * 2 + H * 4 + H * O * 2 + O * 4
                      + B_pad * O * 4)

    out = pl.pallas_call(
        mlp_kernel,
        out_shape=jax.ShapeDtypeStruct((B_pad, O), jnp.float32),
        grid_spec=pltpu.PrefetchScalarGridSpec(
            num_scalar_prefetch=0,
            grid=grid,
            in_specs=[
                # x: tiled over batch, true lane width (last dim == full F).
                pl.BlockSpec((TB, F), lambda i: (i, 0)),
                # weights / biases: VMEM-resident across all batch steps.
                pl.BlockSpec((F, H), lambda i: (0, 0)),
                pl.BlockSpec((1, H), lambda i: (0, 0)),
                pl.BlockSpec((H, O), lambda i: (0, 0)),
                pl.BlockSpec((1, O), lambda i: (0, 0)),
            ],
            out_specs=pl.BlockSpec((TB, O), lambda i: (i, 0)),
        ),
        compiler_params=pltpu.CompilerParams(
            dimension_semantics=("parallel",),
            vmem_limit_bytes=vmem_limit,
        ),
        cost_estimate=pl.CostEstimate(
            flops=flops, transcendentals=0, bytes_accessed=bytes_accessed),
    )(x, w1_t, b1_r, w2_t, b2_r)

    if B_pad != B:
        out = out[:B]
    return out


def init_params(key, n_feature, n_hidden, n_output):
    """Deterministic init mimicking torch.nn.Linear's U(-1/sqrt(fan_in), ...)."""
    k1, k2, k3, k4 = jax.random.split(key, 4)
    lim1 = 1.0 / jnp.sqrt(jnp.float32(n_feature))
    lim2 = 1.0 / jnp.sqrt(jnp.float32(n_hidden))
    # PyTorch stores (out, in); prepare_params transposes once.
    w1 = jax.random.uniform(k1, (n_hidden, n_feature), jnp.float32, -lim1, lim1)
    b1 = jax.random.uniform(k2, (n_hidden,), jnp.float32, -lim1, lim1)
    w2 = jax.random.uniform(k3, (n_output, n_hidden), jnp.float32, -lim2, lim2)
    b2 = jax.random.uniform(k4, (n_output,), jnp.float32, -lim2, lim2)
    return w1, b1, w2, b2


if __name__ == "__main__":
    key = jax.random.PRNGKey(0)
    kx, kx2, kp = jax.random.split(key, 3)

    # Small shapes consistent with Net(n_feature, n_hidden, n_output).
    n_feature, n_hidden, n_output = 16, 32, 4
    w1, b1, w2, b2 = init_params(kp, n_feature, n_hidden, n_output)
    params = prepare_params(w1, b1, w2, b2)   # one-time weight prep

    def torch_ref(xv):
        return jnp.maximum(xv @ w1.T + b1, 0.0) @ w2.T + b2

    # Case 1: tiny batch (single grid step, B < 16 -> minimal pad path).
    B1 = 8
    x1 = jax.random.normal(kx, (B1, n_feature), jnp.float32)
    out1 = jax.block_until_ready(net_forward(x1, params))
    assert out1.shape == (B1, n_output)
    assert jnp.allclose(out1, torch_ref(x1), atol=2e-2, rtol=2e-2), (
        float(jnp.max(jnp.abs(out1 - torch_ref(x1)))))

    # Case 2: batch that exercises the multi-step grid + ragged last block.
    B2 = 40
    x2 = jax.random.normal(kx2, (B2, n_feature), jnp.float32)
    out2 = jax.block_until_ready(net_forward(x2, params))
    assert out2.shape == (B2, n_output)
    assert jnp.allclose(out2, torch_ref(x2), atol=2e-2, rtol=2e-2), (
        float(jnp.max(jnp.abs(out2 - torch_ref(x2)))))

    print("KERNEL_OK")
</pallas_src>

<mosaic_0001>
module attributes {stable_mosaic.version = 11 : i64} {
  func.func @mlp_kernel(%arg0: i32, %arg1: memref<16x16xf32, #tpu.memory_space<vmem>>, %arg2: memref<16x32xbf16, #tpu.memory_space<vmem>>, %arg3: memref<1x32xf32, #tpu.memory_space<vmem>>, %arg4: memref<32x4xbf16, #tpu.memory_space<vmem>>, %arg5: memref<1x4xf32, #tpu.memory_space<vmem>>, %arg6: memref<16x4xf32, #tpu.memory_space<vmem>>) attributes {dimension_semantics = [#tpu.dimension_semantics<parallel>], iteration_bounds = array<i64: 1>, scalar_prefetch = 0 : i64, scratch_operands = 0 : i64, tpu.core_type = #tpu.core_type<tc>, window_params = [{transform_indices = @transform_0, window_bounds = array<i64: 16, 16>}, {pipeline_mode = #tpu.pipeline_mode<synchronous>, transform_indices = @transform_1, window_bounds = array<i64: 16, 32>}, {pipeline_mode = #tpu.pipeline_mode<synchronous>, transform_indices = @transform_2, window_bounds = array<i64: 1, 32>}, {pipeline_mode = #tpu.pipeline_mode<synchronous>, transform_indices = @transform_3, window_bounds = array<i64: 32, 4>}, {pipeline_mode = #tpu.pipeline_mode<synchronous>, transform_indices = @transform_4, window_bounds = array<i64: 1, 4>}, {transform_indices = @transform_5, window_bounds = array<i64: 16, 4>}]} {
    %c0 = arith.constant 0 : index
    %c0_0 = arith.constant 0 : index
    %0 = vector.load %arg1[%c0, %c0_0] : memref<16x16xf32, #tpu.memory_space<vmem>>, vector<16x16xf32>
    %1 = arith.truncf %0 : vector<16x16xf32> to vector<16x16xbf16>
    %c0_1 = arith.constant 0 : index
    %c0_2 = arith.constant 0 : index
    %2 = vector.load %arg2[%c0_1, %c0_2] : memref<16x32xbf16, #tpu.memory_space<vmem>>, vector<16x32xbf16>
    %cst = arith.constant dense<0.000000e+00> : vector<16x32xf32>
    %3 = tpu.matmul %1, %2, %cst {dimension_numbers = #tpu.dot_dimension_numbers<[1], [0], [0], [1], [0, 0, 1, 1], [], []>} : vector<16x16xbf16>, vector<16x32xbf16>, vector<16x32xf32> -> vector<16x32xf32>
    %c0_3 = arith.constant 0 : index
    %c0_4 = arith.constant 0 : index
    %4 = vector.load %arg3[%c0_3, %c0_4] : memref<1x32xf32, #tpu.memory_space<vmem>>, vector<1x32xf32>
    %5 = vector.broadcast %4 : vector<1x32xf32> to vector<16x32xf32>
    %6 = arith.addf %3, %5 : vector<16x32xf32>
    %cst_5 = arith.constant 0.000000e+00 : f32
    %7 = vector.broadcast %cst_5 : f32 to vector<16x32xf32>
    %8 = arith.maximumf %6, %7 : vector<16x32xf32>
    %9 = arith.truncf %8 : vector<16x32xf32> to vector<16x32xbf16>
    %c0_6 = arith.constant 0 : index
    %c0_7 = arith.constant 0 : index
    %10 = vector.load %arg4[%c0_6, %c0_7] : memref<32x4xbf16, #tpu.memory_space<vmem>>, vector<32x4xbf16>
    %cst_8 = arith.constant dense<0.000000e+00> : vector<16x4xf32>
    %11 = tpu.matmul %9, %10, %cst_8 {dimension_numbers = #tpu.dot_dimension_numbers<[1], [0], [0], [1], [0, 0, 1, 1], [], []>} : vector<16x32xbf16>, vector<32x4xbf16>, vector<16x4xf32> -> vector<16x4xf32>
    %c0_9 = arith.constant 0 : index
    %c0_10 = arith.constant 0 : index
    %12 = vector.load %arg5[%c0_9, %c0_10] : memref<1x4xf32, #tpu.memory_space<vmem>>, vector<1x4xf32>
    %13 = vector.broadcast %12 : vector<1x4xf32> to vector<16x4xf32>
    %14 = arith.addf %11, %13 : vector<16x4xf32>
    %c0_11 = arith.constant 0 : index
    %c0_12 = arith.constant 0 : index
    %15 = vector.load %arg6[%c0_11, %c0_12] : memref<16x4xf32, #tpu.memory_space<vmem>>, vector<16x4xf32>
    tpu.vector_store %arg6[%c0_11, %c0_12], %14 {strides = array<i32>} : memref<16x4xf32, #tpu.memory_space<vmem>>, vector<16x4xf32>,
    return
  }
  func.func @transform_0(%arg0: i32) -> (i32, i32) {
    %c0_i32 = arith.constant 0 : i32
    %c0_i32_0 = arith.constant 0 : i32
    return %arg0, %c0_i32 : i32, i32
  }
  func.func @transform_1(%arg0: i32) -> (i32, i32) {
    %c0_i32 = arith.constant 0 : i32
    %c0_i32_0 = arith.constant 0 : i32
    %c0_i32_1 = arith.constant 0 : i32
    return %c0_i32, %c0_i32_0 : i32, i32
  }
  func.func @transform_2(%arg0: i32) -> (i32, i32) {
    %c0_i32 = arith.constant 0 : i32
    %c0_i32_0 = arith.constant 0 : i32
    %c0_i32_1 = arith.constant 0 : i32
    return %c0_i32, %c0_i32_0 : i32, i32
  }
  func.func @transform_3(%arg0: i32) -> (i32, i32) {
    %c0_i32 = arith.constant 0 : i32
    %c0_i32_0 = arith.constant 0 : i32
    %c0_i32_1 = arith.constant 0 : i32
    return %c0_i32, %c0_i32_0 : i32, i32
  }
  func.func @transform_4(%arg0: i32) -> (i32, i32) {
    %c0_i32 = arith.constant 0 : i32
    %c0_i32_0 = arith.constant 0 : i32
    %c0_i32_1 = arith.constant 0 : i32
    return %c0_i32, %c0_i32_0 : i32, i32
  }
  func.func @transform_5(%arg0: i32) -> (i32, i32) {
    %c0_i32 = arith.constant 0 : i32
    %c0_i32_0 = arith.constant 0 : i32
    return %arg0, %c0_i32 : i32, i32
  }
}

</mosaic_0001>

<llo_original>
// kernel: tpu_custom_call.1
$region0: #{tpu_custom_call.1}
  #allocation0 [shape = 'u32[]', space=smem, size = 0x4, offset = 0x4, fixed_abs, tag = 'smem constant byte address 0x4 - core index']
  #allocation1 [shape = 'u32[144,128]{1,0:T(1,128)}', space=vmem, size = 0x12000, scoped, tag = 'internal scratch']
  %s0 = inlined_call_operand.vmem [shape: f32[16,16], index: 0, kind: input, shape index: {}]
  %s1 = inlined_call_operand.hbm [shape: bf16[16,32], index: 1, kind: input, shape index: {}]
  %s2 = inlined_call_operand.vmem [shape: f32[1,32], index: 2, kind: input, shape index: {}]
  %s3 = inlined_call_operand.vmem [shape: bf16[32,4], index: 3, kind: input, shape index: {}]
  %s4 = inlined_call_operand.vmem [shape: f32[1,4], index: 4, kind: input, shape index: {}]
  %s5 = inlined_call_operand.vmem [shape: f32[16,4], index: 5, kind: output, shape index: {}]
  %s6 = sld [smem:[#allocation0]]
  $region34: #{tpu_custom_call.1} parent=0
    _
  %s8 = ssub.s32 1, %s6
  %s9 = scalar_select 0, %s8, %s6
  $region1: #{tpu_custom_call.1} parent=0
    #allocation2 [shape = 'u8[4096]{0}', space=vmem, size = 0x1000, scoped, tag = 'input window, operand 1, single buffered']
    #allocation3 [shape = 's32[1]{0}', space=sflag, size = 0x4, scoped, tag = 'scoped memory for tpu_custom_call.1']
    %10 = vsyncpa [#allocation3], 0
    // Predicated region
    $region2: #{tpu_custom_call.1} parent=1 // pred_check
      _
    $region3: #{tpu_custom_call.1} parent=1 // pred_check_branch
      %12 = sbr.rel (0) target = $region5
    $region4: #{tpu_custom_call.1} parent=1 // pred_region
      _
    $region5: #{tpu_custom_call.1} parent=1 // pred_fallthru
      _
    // Predicated region
    $region6: #{tpu_custom_call.1} parent=1 // pred_check
      _
    $region7: #{tpu_custom_call.1} parent=1 // pred_check_branch
      %14 = sbr.rel (0) target = $region9
    $region8: #{tpu_custom_call.1} parent=1 // pred_region
      %s16 = ssub.s32 128, 128
      %17 = vsyncadd [#allocation3], %s16
      %s18 = sshll.u32 [#allocation2], 4
      %s19 = int_to_ptr.vmem [resolvable:$true] %s18
      %24 = dma.hbm_to_vmem [thread:$0]  %s1, 128, %s19, [#allocation3], 64, 64, 4
    $region9: #{tpu_custom_call.1} parent=1 // pred_fallthru
      _
    // Predicated region
    $region10: #{tpu_custom_call.1} parent=1 // pred_check
      _
    $region11: #{tpu_custom_call.1} parent=1 // pred_check_branch
      %26 = sbr.rel (0) target = $region13
    $region12: #{tpu_custom_call.1} parent=1 // pred_region
      _
    $region13: #{tpu_custom_call.1} parent=1 // pred_fallthru
      _
    // Predicated region
    $region14: #{tpu_custom_call.1} parent=1 // pred_check
      _
    $region15: #{tpu_custom_call.1} parent=1 // pred_check_branch
      %28 = sbr.rel (0) target = $region17
    $region16: #{tpu_custom_call.1} parent=1 // pred_region
      _
    $region17: #{tpu_custom_call.1} parent=1 // pred_fallthru
      _
    // Predicated region
    $region18: #{tpu_custom_call.1} parent=1 // pred_check
      _
    $region19: #{tpu_custom_call.1} parent=1 // pred_check_branch
      %30 = sbr.rel (0) target = $region21
    $region20: #{tpu_custom_call.1} parent=1 // pred_region
      _
    $region21: #{tpu_custom_call.1} parent=1 // pred_fallthru
      _
    // Predicated region
    $region22: #{tpu_custom_call.1} parent=1 // pred_check
      _
    $region23: #{tpu_custom_call.1} parent=1 // pred_check_branch
      %32 = sbr.rel (0) target = $region25
    $region24: #{tpu_custom_call.1} parent=1 // pred_region
      %33 = dma.done [#allocation3], 128
    $region25: #{tpu_custom_call.1} parent=1 // pred_fallthru
      _
    %v35 = vld [vmem:[%s0] sm:$0xff]
    %v36 = vld [vmem:[%s0 + $0x8] sm:$0xff]
    %v37 = vpack.c.bf16 %v36, %v35
    %v38 = vld [vmem:[#allocation2] sm:$0xf]
    %v39 = vld [vmem:[#allocation2 + $0x4] sm:$0xf]
    %v40 = vld [vmem:[%s2] sm:$0x1]
    %v42 = vlaneseq
    %v43 = vshrl.u32 %v42, 7
    %v44 = vsub.s32 0, %v43
    %v45 = vrot.slane %v40, %v44
    %v49 = vunpack.c.l.b16 %v38
    %v50 = vunpack.c.l.b16 %v39
    %v51 = vpack.c.b16 %v50, %v49
    %vm53 = vcmask 130048
    %v55 = vsel %vm53, %v37, 0
    %57 = vmatprep.subr.bf16.mxu0 0
    %58 = vmatpush1.bf16.msra.mxu0 %v51
    %59 = vmatprep.subr.bf16.mxu0 0
    %60 = vmatpush1.bf16.msra.mxu0 0
    %61 = vmatprep.subr.bf16.mxu0 0
    %62 = vmatpush1.bf16.msra.mxu0 0
    %63 = vmatprep.subr.bf16.mxu0 0
    %64 = vmatpush1.bf16.msra.mxu0 0
    %65 = vmatprep.subr.bf16.mxu0 0
    %66 = vmatpush1.bf16.msra.mxu0 0
    %67 = vmatprep.subr.bf16.mxu0 0
    %68 = vmatpush1.bf16.msra.mxu0 0
    %69 = vmatprep.subr.bf16.mxu0 0
    %70 = vmatpush1.bf16.msra.mxu0 0
    %71 = vmatprep.subr.bf16.mxu0 0
    %72 = vmatpush1.bf16.msra.mxu0 0
    %73 = vmatprep.subr.bf16.mxu0 0
    %74 = vmatpush1.bf16.msra.mxu0 0
    %75 = vmatprep.subr.bf16.mxu0 0
    %76 = vmatpush1.bf16.msra.mxu0 0
    %77 = vmatprep.subr.bf16.mxu0 0
    %78 = vmatpush1.bf16.msra.mxu0 0
    %79 = vmatprep.subr.bf16.mxu0 0
    %80 = vmatpush1.bf16.msra.mxu0 0
    %81 = vmatprep.subr.bf16.mxu0 0
    %82 = vmatpush1.bf16.msra.mxu0 0
    %83 = vmatprep.subr.bf16.mxu0 0
    %84 = vmatpush1.bf16.msra.mxu0 0
    %85 = vmatprep.subr.bf16.mxu0 0
    %86 = vmatpush1.bf16.msra.mxu0 0
    %87 = vmatprep.subr.bf16.mxu0 0
    %88 = vmatpush1.bf16.msra.mxu0 0
    %89 = vmatprep.mubr.bf16.mxu0 0
    %90 = vmatmul.mubr.bf16.gmra.mrb[0].mxu0 %v55
    %v91 = vpop.f32.mrb[0].mxu0
    %v92 = vadd.f32 %v45, %v91
    %v93 = vpop.f32.mrb[0].mxu0
    %v94 = vpop.f32.mrb[0].mxu0
    %v95 = vadd.f32 %v45, %v94
    %v96 = vpop.f32.mrb[0].mxu0
    %97 = vdwg.mxu0
    %v98 = vmax.f32 %v92, 0.0
    %v99 = vmax.f32 %v95, 0.0
    %v100 = vpack.c.bf16 %v99, %v98
    %v101 = vld [vmem:[%s3] sm:$0xf]
    %v102 = vld [vmem:[%s3 + $0x4] sm:$0xf]
    %v103 = vld [vmem:[%s3 + $0x8] sm:$0xf]
    %v104 = vld [vmem:[%s3 + $0xc] sm:$0xf]
    %v105 = vld [vmem:[%s4] sm:$0x1]
    %v107 = vlaneseq
    %v108 = vshrl.u32 %v107, 7
    %v109 = vsub.s32 0, %v108
    %v110 = vrot.slane %v105, %v109
    %v116 = vunpack.c.l.b16 %v101
    %v117 = vunpack.c.l.b16 %v102
    %v118 = vunpack.c.l.b16 %v103
    %v119 = vunpack.c.l.b16 %v104
    %v120 = vpack.c.b16 %v117, %v116
    %v121 = vpack.c.b16 %v119, %v118
    %vm124 = vcmask 261120
    %v126 = vsel %vm124, %v100, 0
    %128 = vmatprep.subr.bf16.mxu0 0
    %129 = vmatpush1.bf16.msra.mxu0 %v120
    %130 = vmatprep.subr.bf16.mxu0 0
    %131 = vmatpush1.bf16.msra.mxu0 %v121
    %132 = vmatprep.subr.bf16.mxu0 0
    %133 = vmatpush1.bf16.msra.mxu0 0
    %134 = vmatprep.subr.bf16.mxu0 0
    %135 = vmatpush1.bf16.msra.mxu0 0
    %136 = vmatprep.subr.bf16.mxu0 0
    %137 = vmatpush1.bf16.msra.mxu0 0
    %138 = vmatprep.subr.bf16.mxu0 0
    %139 = vmatpush1.bf16.msra.mxu0 0
    %140 = vmatprep.subr.bf16.mxu0 0
    %141 = vmatpush1.bf16.msra.mxu0 0
    %142 = vmatprep.subr.bf16.mxu0 0
    %143 = vmatpush1.bf16.msra.mxu0 0
    %144 = vmatprep.subr.bf16.mxu0 0
    %145 = vmatpush1.bf16.msra.mxu0 0
    %146 = vmatprep.subr.bf16.mxu0 0
    %147 = vmatpush1.bf16.msra.mxu0 0
    %148 = vmatprep.subr.bf16.mxu0 0
    %149 = vmatpush1.bf16.msra.mxu0 0
    %150 = vmatprep.subr.bf16.mxu0 0
    %151 = vmatpush1.bf16.msra.mxu0 0
    %152 = vmatprep.subr.bf16.mxu0 0
    %153 = vmatpush1.bf16.msra.mxu0 0
    %154 = vmatprep.subr.bf16.mxu0 0
    %155 = vmatpush1.bf16.msra.mxu0 0
    %156 = vmatprep.subr.bf16.mxu0 0
    %157 = vmatpush1.bf16.msra.mxu0 0
    %158 = vmatprep.subr.bf16.mxu0 0
    %159 = vmatpush1.bf16.msra.mxu0 0
    %160 = vmatprep.mubr.bf16.mxu0 0
    %161 = vmatmul.mubr.bf16.gmra.mrb[0].mxu0 %v126
    %v162 = vpop.f32.mrb[0].mxu0
    %v163 = vadd.f32 %v110, %v162
    %v164 = vpop.f32.mrb[0].mxu0
    %v165 = vpop.f32.mrb[0].mxu0
    %v166 = vadd.f32 %v110, %v165
    %v167 = vpop.f32.mrb[0].mxu0
    %168 = vdwg.mxu0
    %vm169 = vcmask 31744
    %170 = vst.msk [vmem:[%s5] sm:$0xff] %vm169, %v163
    %171 = vst.msk [vmem:[%s5 + $0x8] sm:$0xff] %vm169, %v166
    // Predicated region
    $region26: #{tpu_custom_call.1} parent=1 // pred_check
      _
    $region27: #{tpu_custom_call.1} parent=1 // pred_check_branch
      %173 = sbr.rel (0) target = $region29
    $region28: #{tpu_custom_call.1} parent=1 // pred_region
      _
    $region29: #{tpu_custom_call.1} parent=1 // pred_fallthru
      _
    // Predicated region
    $region30: #{tpu_custom_call.1} parent=1 // pred_check
      _
    $region31: #{tpu_custom_call.1} parent=1 // pred_check_branch
      %175 = sbr.rel (0) target = $region33
    $region32: #{tpu_custom_call.1} parent=1 // pred_region
      _
    $region33: #{tpu_custom_call.1} parent=1 // pred_fallthru
      _
    %176 = vsyncpa [#allocation3], 1

</llo_original>
